<compile_context>
chip_gen: v5e
topology: v5e:2x2
jax: 0.10.0
libtpu: 0.0.40
codegen_flags: <defaults>
</compile_context>

<pallas_src>
import functools

import jax
import jax.numpy as jnp
from jax.experimental import pallas as pl
from jax.experimental.pallas import tpu as pltpu


# which loss terms each mode needs (static, trace-time specialization)
_NEEDS = {
    "normal":  dict(kl=True,  ce=True,  nckd=False, tckd=False),
    "nckd":    dict(kl=False, ce=False, nckd=True,  tckd=False),
    "tckd":    dict(kl=False, ce=False, nckd=False, tckd=True),
    "dkd":     dict(kl=False, ce=True,  nckd=True,  tckd=True),
    "ce+nckd": dict(kl=False, ce=True,  nckd=True,  tckd=False),
    "ce+tckd": dict(kl=False, ce=True,  nckd=False, tckd=True),
}


def _log_softmax(x):
    m = jnp.max(x, axis=1, keepdims=True)
    z = x - m
    return z - jnp.log(jnp.sum(jnp.exp(z), axis=1, keepdims=True))


def _dkd_kernel(tgt_ref, t_ref, s_ref, out_ref, acc_ref, *,
                temperature, mode, batch, block_b, blocks_per_split):
    # tgt_ref: (TB, 1) int32     t_ref / s_ref: (TB, C) native dtype
    # out_ref: (1, 8, 128) f32   acc_ref: (1, 8, 128) f32 VMEM scratch
    c = pl.program_id(0)          # batch split (parallel; one per TC on v7x)
    b = pl.program_id(1)          # block within split (arbitrary; accumulate)

    @pl.when(b == 0)
    def _init():
        acc_ref[...] = jnp.zeros_like(acc_ref)

    need = _NEEDS[mode]
    need_kl, need_ce = need["kl"], need["ce"]
    need_nckd, need_tckd = need["nckd"], need["tckd"]
    need_t = need_kl or need_nckd or need_tckd   # True for every mode

    s = s_ref[...].astype(jnp.float32)
    t = t_ref[...].astype(jnp.float32)
    tgt = tgt_ref[...]                           # (TB, 1) int32
    tb, C = s.shape
    inv_T = jnp.float32(1.0 / temperature)

    # Global row index of this tile (unclamped, so dummy / partial-tile rows
    # land past `batch` and are masked out below).
    g = c * blocks_per_split + b
    rid = jax.lax.broadcasted_iota(jnp.int32, (tb, 1), 0) + g * block_b
    rvalid = rid < batch                         # (TB, 1) bool

    cls = jax.lax.broadcasted_iota(jnp.int32, (tb, C), 1)
    gt = (cls == tgt).astype(jnp.float32)        # one-hot gt mask

    kl_s = ce_s = nckd_s = tckd_s = None

    if need_t:
        lp_s = _log_softmax(s * inv_T)           # log softmax(student / T)
        lp_t = _log_softmax(t * inv_T)           # log softmax(teacher / T)
        p_t = jnp.exp(lp_t)                      # softmax(teacher / T)

    if need_kl or need_nckd:
        d = lp_t - lp_s

    if need_kl:
        kl_rows = jnp.sum(p_t * d, axis=1, keepdims=True)
        kl_s = jnp.sum(jnp.where(rvalid, kl_rows, 0.0))

    if need_ce:
        if temperature == 1.0 and need_t:
            lp_s1 = lp_s
        else:
            lp_s1 = _log_softmax(s)
        ce_rows = -jnp.sum(gt * lp_s1, axis=1, keepdims=True)
        ce_s = jnp.sum(jnp.where(rvalid, ce_rows, 0.0))

    if need_nckd or need_tckd:
        eps = jnp.float32(1e-30)
        other = 1.0 - gt
        # per-row target / non-target probabilities at temperature T
        lp_s_gt = jnp.sum(gt * lp_s, axis=1, keepdims=True)   # log p_s[gt]
        pt_gt = jnp.sum(gt * p_t, axis=1, keepdims=True)
        pt_oth = jnp.sum(other * p_t, axis=1, keepdims=True)
        ps_oth = jnp.maximum(1.0 - jnp.exp(lp_s_gt), eps)     # (TB,1) exp only
        log_pt_oth = jnp.log(jnp.maximum(pt_oth, eps))
        log_ps_oth = jnp.log(ps_oth)

    if need_nckd:
        # Masked-softmax KL derived from the unmasked distributions:
        #   sum_{j!=gt} q_t_j (log q_t_j - log q_s_j)
        #     = cross / pt_oth - (log pt_oth - log ps_oth)
        # (numerically identical to the -1000*gt masking up to e^{-1000/T}).
        cross = jnp.sum(other * p_t * d, axis=1, keepdims=True)
        nckd_rows = cross / jnp.maximum(pt_oth, eps) - (log_pt_oth - log_ps_oth)
        nckd_s = jnp.sum(jnp.where(rvalid, nckd_rows, 0.0))

    if need_tckd:
        # binary (target vs non-target) KL; log p_s[gt] is lp_s_gt exactly,
        # eps-clamped logs keep 0*log(0)-style rows finite.
        tckd_rows = (pt_gt * (jnp.log(jnp.maximum(pt_gt, eps)) - lp_s_gt)
                     + pt_oth * (log_pt_oth - log_ps_oth))
        tckd_s = jnp.sum(jnp.where(rvalid, tckd_rows, 0.0))

    # Accumulate the (up to) 4 scalars into a lane-dense vector:
    # lane 0 = kl, 1 = ce, 2 = nckd, 3 = tckd.
    lane = jax.lax.broadcasted_iota(jnp.int32, acc_ref.shape, 2)
    contrib = jnp.zeros(acc_ref.shape, jnp.float32)
    for idx, val in ((0, kl_s), (1, ce_s), (2, nckd_s), (3, tckd_s)):
        if val is not None:
            contrib = contrib + jnp.where(lane == idx, val, 0.0)
    acc_ref[...] += contrib

    @pl.when(b == pl.num_programs(1) - 1)
    def _finish():
        out_ref[...] = acc_ref[...]


def _round_up(x, m):
    return ((x + m - 1) // m) * m


def _pick_block_b(B, C):
    # Keep a single f32 (TB, C) tile around <= 1 MiB (plenty of headroom for
    # the in-kernel temporaries + double-buffered inputs on v5e/v6e/v7x).
    tb = (1 << 20) // max(C * 4, 1)
    tb = max(8, min(1024, (tb // 8) * 8))
    return min(tb, _round_up(B, 8))


def dkd_partial_sums(teacher_logits, student_logits, target, *,
                     temperature, mode, block_b=None):
    """Returns f32[4] = [kl_sum, ce_sum, nckd_sum, tckd_sum] (un-normalized
    per-batch sums; entries not required by `mode` are 0)."""
    B, C = student_logits.shape
    assert teacher_logits.shape == (B, C)

    tb = block_b if block_b is not None else _pick_block_b(B, C)
    tb = max(8, (tb // 8) * 8)
    nb_total = pl.cdiv(B, tb)
    n_split = 2 if nb_total >= 2 else 1       # v7x: one split per TensorCore
    nb = pl.cdiv(nb_total, n_split)

    tgt = target.reshape(B, 1).astype(jnp.int32)

    if n_split * nb == nb_total:
        def logit_map(c, b):
            return (c * nb + b, 0)
    else:
        # Odd block count: the trailing dummy block is clamped to the last
        # real block; its rows index past `batch` and are masked in-kernel.
        def logit_map(c, b):
            return (jnp.minimum(c * nb + b, nb_total - 1), 0)

    kernel = functools.partial(
        _dkd_kernel, temperature=float(temperature), mode=mode,
        batch=B, block_b=tb, blocks_per_split=nb)

    out = pl.pallas_call(
        kernel,
        out_shape=jax.ShapeDtypeStruct((n_split, 8, 128), jnp.float32),
        grid=(n_split, nb),
        in_specs=[
            pl.BlockSpec((tb, 1), logit_map),   # target (per-tile, pipelined)
            pl.BlockSpec((tb, C), logit_map),   # teacher logits (native dtype)
            pl.BlockSpec((tb, C), logit_map),   # student logits (native dtype)
        ],
        out_specs=pl.BlockSpec((1, 8, 128), lambda c, b: (c, 0, 0)),
        scratch_shapes=[pltpu.VMEM((1, 8, 128), jnp.float32)],
        compiler_params=pltpu.CompilerParams(
            dimension_semantics=("parallel", "arbitrary"),
            vmem_limit_bytes=32 * 1024 * 1024),
    )(tgt, teacher_logits, student_logits)

    return out[:, 0, :4].sum(axis=0)            # reduce over splits -> (4,)


class DKD:
    """JAX/Pallas port of the PyTorch DKD module's forward pass."""

    def __init__(self, T=2, dkd_alpha=1.0, dkd_beta=1.0, ce_weight=1.0,
                 kl_weight=0.9, block_b=None):
        assert T >= 1, "Temperature T should be in [1, +infty)"
        self.T = T
        self.dkd_alpha = dkd_alpha
        self.dkd_beta = dkd_beta
        self.ce_weight = ce_weight
        self.kl_weight = kl_weight
        self.block_b = block_b
        # bookkeeping attributes mirroring the PyTorch module (lazy scalars,
        # no forced device sync).  TODO(synk): PyTorch stores .item() floats.
        self.tckd_loss = 0.0
        self.nckd_loss = 0.0
        self.kl_loss = 0.0
        self.ce_loss = 0.0

    def __call__(self, teacher_logits, student_logits, target, mode="normal"):
        if mode not in _NEEDS:
            raise ValueError(f"unknown mode {mode}")
        B = student_logits.shape[0]
        sums = dkd_partial_sums(teacher_logits, student_logits, target,
                                temperature=self.T, mode=mode,
                                block_b=self.block_b)
        T2 = float(self.T) ** 2
        inv_B = 1.0 / B
        kl_loss = sums[0] * inv_B * T2      # F.kl_div(..., 'batchmean') * T^2
        ce_loss = sums[1] * inv_B           # CrossEntropyLoss (mean)
        nckd_loss = sums[2] * inv_B * T2
        tckd_loss = sums[3] * inv_B * T2

        if mode == "normal":
            self.kl_loss, self.ce_loss = kl_loss, ce_loss
            return self.kl_weight * kl_loss + self.ce_weight * ce_loss
        if mode == "nckd":
            self.nckd_loss = nckd_loss
            return self.dkd_beta * nckd_loss
        if mode == "tckd":
            self.tckd_loss = tckd_loss
            return self.dkd_alpha * tckd_loss
        if mode == "dkd":
            self.ce_loss, self.nckd_loss, self.tckd_loss = (
                ce_loss, nckd_loss, tckd_loss)
            return (self.ce_weight * ce_loss + self.dkd_alpha * tckd_loss
                    + self.dkd_beta * nckd_loss)
        if mode == "ce+nckd":
            self.ce_loss, self.nckd_loss = ce_loss, nckd_loss
            return self.ce_weight * ce_loss + self.dkd_beta * nckd_loss
        # mode == "ce+tckd"
        self.ce_loss, self.tckd_loss = ce_loss, tckd_loss
        return self.ce_weight * ce_loss + self.dkd_alpha * tckd_loss


# ---------------- pure-JAX reference (for sanity check only) ----------------
def _ref_losses(t_logits, s_logits, target, T):
    B, C = s_logits.shape
    gt = jax.nn.one_hot(target, C, dtype=jnp.float32)
    other = 1.0 - gt
    lp_s = jax.nn.log_softmax(s_logits / T, axis=1)
    lp_t = jax.nn.log_softmax(t_logits / T, axis=1)
    p_t = jnp.exp(lp_t)
    kl = jnp.sum(p_t * (lp_t - lp_s)) / B * T ** 2
    ce = -jnp.sum(gt * jax.nn.log_softmax(s_logits, axis=1)) / B
    lp_s2 = jax.nn.log_softmax(s_logits / T - 1000.0 * gt, axis=1)
    lp_t2 = jax.nn.log_softmax(t_logits / T - 1000.0 * gt, axis=1)
    p_t2 = jnp.exp(lp_t2)
    nckd = jnp.sum(p_t2 * (lp_t2 - lp_s2)) / B * T ** 2
    p_s = jnp.exp(lp_s)
    ps = jnp.concatenate([(p_s * gt).sum(1, keepdims=True),
                          (p_s * other).sum(1, keepdims=True)], axis=1)
    pt = jnp.concatenate([(p_t * gt).sum(1, keepdims=True),
                          (p_t * other).sum(1, keepdims=True)], axis=1)
    tckd = jnp.sum(pt * (jnp.log(pt) - jnp.log(ps))) / B * T ** 2
    return kl, ce, nckd, tckd


if __name__ == "__main__":
    key = jax.random.PRNGKey(0)

    def make_inputs(k, B, C, scale=2.0, dtype=jnp.float32):
        k1, k2, k3 = jax.random.split(k, 3)
        t = (jax.random.normal(k1, (B, C), jnp.float32) * scale).astype(dtype)
        s = (jax.random.normal(k2, (B, C), jnp.float32) * scale).astype(dtype)
        y = jax.random.randint(k3, (B,), 0, C, dtype=jnp.int32)
        return t, s, y

    def check(got, want, name, tol=1e-4):
        got = jax.block_until_ready(got)
        assert jnp.allclose(got, want, rtol=tol, atol=tol), (name, got, want)

    T = 2
    dkd = DKD(T=T, dkd_alpha=1.0, dkd_beta=1.0, ce_weight=1.0, kl_weight=0.9)
    k1, k2, k3 = jax.random.split(key, 3)

    # --- test 1: small batch, single block ---------------------------------
    t1, s1, y1 = make_inputs(k1, 8, 128)
    kl, ce, nckd, tckd = _ref_losses(t1, s1, y1, T)
    check(dkd(t1, s1, y1, mode="normal"), 0.9 * kl + ce, "normal")
    check(dkd(t1, s1, y1, mode="dkd"), ce + tckd + nckd, "dkd")

    # --- test 2: batch not a multiple of the block (partial-tile masking) --
    t2, s2, y2 = make_inputs(k2, 13, 128)
    kl, ce, nckd, tckd = _ref_losses(t2, s2, y2, T)
    check(dkd(t2, s2, y2, mode="nckd"), nckd, "nckd")
    check(dkd(t2, s2, y2, mode="tckd"), tckd, "tckd")
    check(dkd(t2, s2, y2, mode="ce+nckd"), ce + nckd, "ce+nckd")

    # --- test 3: multi-block grid with 2-way (TensorCore) split ------------
    dkd_split = DKD(T=T, kl_weight=0.9, block_b=8)
    t3, s3, y3 = make_inputs(k3, 24, 128)
    kl, ce, nckd, tckd = _ref_losses(t3, s3, y3, T)
    check(dkd_split(t3, s3, y3, mode="normal"), 0.9 * kl + ce, "normal/split")
    check(dkd_split(t3, s3, y3, mode="dkd"), ce + tckd + nckd, "dkd/split")

    # --- test 4: bf16 logits stream in their native dtype ------------------
    t4, s4 = t1.astype(jnp.bfloat16), s1.astype(jnp.bfloat16)
    kl, ce, _, _ = _ref_losses(t4.astype(jnp.float32),
                               s4.astype(jnp.float32), y1, T)
    check(dkd(t4, s4, y1, mode="normal"), 0.9 * kl + ce, "normal/bf16",
          tol=2e-3)

    print("KERNEL_OK")
</pallas_src>

<mosaic_0001>
module attributes {stable_mosaic.version = 11 : i64} {
  func.func @_dkd_kernel(%arg0: i32, %arg1: i32, %arg2: memref<8x1xi32, #tpu.memory_space<vmem>>, %arg3: memref<8x128xf32, #tpu.memory_space<vmem>>, %arg4: memref<8x128xf32, #tpu.memory_space<vmem>>, %arg5: memref<1x8x128xf32, #tpu.memory_space<vmem>>, %arg6: memref<1x8x128xf32, #tpu.memory_space<vmem>>) attributes {dimension_semantics = [#tpu.dimension_semantics<parallel>, #tpu.dimension_semantics<arbitrary>], iteration_bounds = array<i64: 1, 1>, scalar_prefetch = 0 : i64, scratch_operands = 1 : i64, tpu.core_type = #tpu.core_type<tc>, window_params = [{transform_indices = @transform_0, window_bounds = array<i64: 8, 1>}, {transform_indices = @transform_1, window_bounds = array<i64: 8, 128>}, {transform_indices = @transform_2, window_bounds = array<i64: 8, 128>}, {transform_indices = @transform_3, window_bounds = array<i64: 1, 8, 128>}]} {
    %c0_i32 = arith.constant 0 : i32
    %0 = arith.cmpi eq, %arg1, %c0_i32 : i32
    %1 = arith.extui %0 : i1 to i32
    %c0_i32_0 = arith.constant 0 : i32
    %2 = arith.cmpi ne, %1, %c0_i32_0 : i32
    scf.if %2 {
      %cst_34 = arith.constant 0.000000e+00 : f32
      %95 = vector.broadcast %cst_34 : f32 to vector<1x8x128xf32>
      %c0_35 = arith.constant 0 : index
      %c0_36 = arith.constant 0 : index
      %c0_37 = arith.constant 0 : index
      %96 = vector.load %arg6[%c0_35, %c0_36, %c0_37] : memref<1x8x128xf32, #tpu.memory_space<vmem>>, vector<1x8x128xf32>
      tpu.vector_store %arg6[%c0_35, %c0_36, %c0_37], %95 {strides = array<i32>} : memref<1x8x128xf32, #tpu.memory_space<vmem>>, vector<1x8x128xf32>,
    } else {
    }
    %c0 = arith.constant 0 : index
    %c0_1 = arith.constant 0 : index
    %3 = vector.load %arg4[%c0, %c0_1] : memref<8x128xf32, #tpu.memory_space<vmem>>, vector<8x128xf32>
    %c0_2 = arith.constant 0 : index
    %c0_3 = arith.constant 0 : index
    %4 = vector.load %arg3[%c0_2, %c0_3] : memref<8x128xf32, #tpu.memory_space<vmem>>, vector<8x128xf32>
    %c0_4 = arith.constant 0 : index
    %c0_5 = arith.constant 0 : index
    %5 = vector.load %arg2[%c0_4, %c0_5] : memref<8x1xi32, #tpu.memory_space<vmem>>, vector<8x1xi32>
    %c1_i32 = arith.constant 1 : i32
    %6 = arith.muli %arg0, %c1_i32 : i32
    %7 = arith.addi %6, %arg1 : i32
    %8 = tpu.iota {dimensions = array<i32: 0>} : vector<8x1xi32>
    %c8_i32 = arith.constant 8 : i32
    %9 = arith.muli %7, %c8_i32 : i32
    %10 = vector.broadcast %9 : i32 to vector<8x1xi32>
    %11 = arith.addi %8, %10 : vector<8x1xi32>
    %c8_i32_6 = arith.constant 8 : i32
    %12 = vector.broadcast %c8_i32_6 : i32 to vector<8x1xi32>
    %13 = arith.cmpi slt, %11, %12 : vector<8x1xi32>
    %14 = tpu.iota {dimensions = array<i32: 1>} : vector<8x128xi32>
    %15 = vector.broadcast %5 : vector<8x1xi32> to vector<8x128xi32>
    %16 = arith.cmpi eq, %14, %15 : vector<8x128xi32>
    %17 = arith.extui %16 : vector<8x128xi1> to vector<8x128xi32>
    %18 = arith.sitofp %17 : vector<8x128xi32> to vector<8x128xf32>
    %cst = arith.constant 5.000000e-01 : f32
    %19 = vector.broadcast %cst : f32 to vector<8x128xf32>
    %20 = arith.mulf %3, %19 : vector<8x128xf32>
    %cst_7 = arith.constant dense<0xFF800000> : vector<8xf32>
    %21 = vector.multi_reduction <maximumf>, %20, %cst_7 [1] : vector<8x128xf32> to vector<8xf32>
    %22 = vector.shape_cast %21 : vector<8xf32> to vector<8x1xf32>
    %23 = vector.broadcast %22 : vector<8x1xf32> to vector<8x128xf32>
    %24 = arith.subf %20, %23 : vector<8x128xf32>
    %25 = math.exp %24 : vector<8x128xf32>
    %cst_8 = arith.constant dense<0.000000e+00> : vector<8xf32>
    %26 = vector.multi_reduction <add>, %25, %cst_8 [1] : vector<8x128xf32> to vector<8xf32>
    %27 = vector.shape_cast %26 : vector<8xf32> to vector<8x1xf32>
    %28 = math.log %27 : vector<8x1xf32>
    %29 = vector.broadcast %28 : vector<8x1xf32> to vector<8x128xf32>
    %30 = arith.subf %24, %29 : vector<8x128xf32>
    %cst_9 = arith.constant 5.000000e-01 : f32
    %31 = vector.broadcast %cst_9 : f32 to vector<8x128xf32>
    %32 = arith.mulf %4, %31 : vector<8x128xf32>
    %cst_10 = arith.constant dense<0xFF800000> : vector<8xf32>
    %33 = vector.multi_reduction <maximumf>, %32, %cst_10 [1] : vector<8x128xf32> to vector<8xf32>
    %34 = vector.shape_cast %33 : vector<8xf32> to vector<8x1xf32>
    %35 = vector.broadcast %34 : vector<8x1xf32> to vector<8x128xf32>
    %36 = arith.subf %32, %35 : vector<8x128xf32>
    %37 = math.exp %36 : vector<8x128xf32>
    %cst_11 = arith.constant dense<0.000000e+00> : vector<8xf32>
    %38 = vector.multi_reduction <add>, %37, %cst_11 [1] : vector<8x128xf32> to vector<8xf32>
    %39 = vector.shape_cast %38 : vector<8xf32> to vector<8x1xf32>
    %40 = math.log %39 : vector<8x1xf32>
    %41 = vector.broadcast %40 : vector<8x1xf32> to vector<8x128xf32>
    %42 = arith.subf %36, %41 : vector<8x128xf32>
    %43 = math.exp %42 : vector<8x128xf32>
    %44 = arith.subf %42, %30 : vector<8x128xf32>
    %45 = arith.mulf %43, %44 : vector<8x128xf32>
    %cst_12 = arith.constant dense<0.000000e+00> : vector<8xf32>
    %46 = vector.multi_reduction <add>, %45, %cst_12 [1] : vector<8x128xf32> to vector<8xf32>
    %47 = vector.shape_cast %46 : vector<8xf32> to vector<8x1xf32>
    %cst_13 = arith.constant 0.000000e+00 : f32
    %48 = vector.broadcast %cst_13 : f32 to vector<8x1xf32>
    %49 = arith.select %13, %47, %48 : vector<8x1xi1>, vector<8x1xf32>
    %50 = vector.shape_cast %49 : vector<8x1xf32> to vector<1x8x1xf32>
    %cst_14 = arith.constant dense<0.000000e+00> : vector<1xf32>
    %51 = vector.multi_reduction <add>, %50, %cst_14 [1, 2] : vector<1x8x1xf32> to vector<1xf32>
    %52 = vector.shape_cast %51 : vector<1xf32> to vector<1x1x1xf32>
    %53 = vector.extract %52[0, 0, 0] : f32 from vector<1x1x1xf32>
    %cst_15 = arith.constant dense<0xFF800000> : vector<8xf32>
    %54 = vector.multi_reduction <maximumf>, %3, %cst_15 [1] : vector<8x128xf32> to vector<8xf32>
    %55 = vector.shape_cast %54 : vector<8xf32> to vector<8x1xf32>
    %56 = vector.broadcast %55 : vector<8x1xf32> to vector<8x128xf32>
    %57 = arith.subf %3, %56 : vector<8x128xf32>
    %58 = math.exp %57 : vector<8x128xf32>
    %cst_16 = arith.constant dense<0.000000e+00> : vector<8xf32>
    %59 = vector.multi_reduction <add>, %58, %cst_16 [1] : vector<8x128xf32> to vector<8xf32>
    %60 = vector.shape_cast %59 : vector<8xf32> to vector<8x1xf32>
    %61 = math.log %60 : vector<8x1xf32>
    %62 = vector.broadcast %61 : vector<8x1xf32> to vector<8x128xf32>
    %63 = arith.subf %57, %62 : vector<8x128xf32>
    %64 = arith.mulf %18, %63 : vector<8x128xf32>
    %cst_17 = arith.constant dense<0.000000e+00> : vector<8xf32>
    %65 = vector.multi_reduction <add>, %64, %cst_17 [1] : vector<8x128xf32> to vector<8xf32>
    %66 = vector.shape_cast %65 : vector<8xf32> to vector<8x1xf32>
    %cst_18 = arith.constant 0.000000e+00 : f32
    %67 = vector.broadcast %cst_18 : f32 to vector<8x1xf32>
    %68 = arith.subf %67, %66 : vector<8x1xf32>
    %cst_19 = arith.constant 0.000000e+00 : f32
    %69 = vector.broadcast %cst_19 : f32 to vector<8x1xf32>
    %70 = arith.select %13, %68, %69 : vector<8x1xi1>, vector<8x1xf32>
    %71 = vector.shape_cast %70 : vector<8x1xf32> to vector<1x8x1xf32>
    %cst_20 = arith.constant dense<0.000000e+00> : vector<1xf32>
    %72 = vector.multi_reduction <add>, %71, %cst_20 [1, 2] : vector<1x8x1xf32> to vector<1xf32>
    %73 = vector.shape_cast %72 : vector<1xf32> to vector<1x1x1xf32>
    %74 = vector.extract %73[0, 0, 0] : f32 from vector<1x1x1xf32>
    %75 = tpu.iota {dimensions = array<i32: 2>} : vector<1x8x128xi32>
    %cst_21 = arith.constant 0.000000e+00 : f32
    %76 = vector.broadcast %cst_21 : f32 to vector<1x8x128xf32>
    %c0_i32_22 = arith.constant 0 : i32
    %77 = vector.broadcast %c0_i32_22 : i32 to vector<1x8x128xi32>
    %78 = arith.cmpi eq, %75, %77 : vector<1x8x128xi32>
    %cst_23 = arith.constant 0.000000e+00 : f32
    %79 = vector.broadcast %53 : f32 to vector<1x8x128xf32>
    %80 = vector.broadcast %cst_23 : f32 to vector<1x8x128xf32>
    %81 = arith.select %78, %79, %80 : vector<1x8x128xi1>, vector<1x8x128xf32>
    %82 = arith.addf %76, %81 : vector<1x8x128xf32>
    %c1_i32_24 = arith.constant 1 : i32
    %83 = vector.broadcast %c1_i32_24 : i32 to vector<1x8x128xi32>
    %84 = arith.cmpi eq, %75, %83 : vector<1x8x128xi32>
    %cst_25 = arith.constant 0.000000e+00 : f32
    %85 = vector.broadcast %74 : f32 to vector<1x8x128xf32>
    %86 = vector.broadcast %cst_25 : f32 to vector<1x8x128xf32>
    %87 = arith.select %84, %85, %86 : vector<1x8x128xi1>, vector<1x8x128xf32>
    %88 = arith.addf %82, %87 : vector<1x8x128xf32>
    %c0_26 = arith.constant 0 : index
    %c0_27 = arith.constant 0 : index
    %c0_28 = arith.constant 0 : index
    %89 = vector.load %arg6[%c0_26, %c0_27, %c0_28] : memref<1x8x128xf32, #tpu.memory_space<vmem>>, vector<1x8x128xf32>
    %90 = arith.addf %89, %88 : vector<1x8x128xf32>
    %c0_29 = arith.constant 0 : index
    %c0_30 = arith.constant 0 : index
    %c0_31 = arith.constant 0 : index
    %91 = vector.load %arg6[%c0_29, %c0_30, %c0_31] : memref<1x8x128xf32, #tpu.memory_space<vmem>>, vector<1x8x128xf32>
    tpu.vector_store %arg6[%c0_29, %c0_30, %c0_31], %90 {strides = array<i32>} : memref<1x8x128xf32, #tpu.memory_space<vmem>>, vector<1x8x128xf32>,
    %c0_i32_32 = arith.constant 0 : i32
    %92 = arith.cmpi eq, %arg1, %c0_i32_32 : i32
    %93 = arith.extui %92 : i1 to i32
    %c0_i32_33 = arith.constant 0 : i32
    %94 = arith.cmpi ne, %93, %c0_i32_33 : i32
    scf.if %94 {
      %c0_34 = arith.constant 0 : index
      %c0_35 = arith.constant 0 : index
      %c0_36 = arith.constant 0 : index
      %95 = vector.load %arg6[%c0_34, %c0_35, %c0_36] : memref<1x8x128xf32, #tpu.memory_space<vmem>>, vector<1x8x128xf32>
      %c0_37 = arith.constant 0 : index
      %c0_38 = arith.constant 0 : index
      %c0_39 = arith.constant 0 : index
      %96 = vector.load %arg5[%c0_37, %c0_38, %c0_39] : memref<1x8x128xf32, #tpu.memory_space<vmem>>, vector<1x8x128xf32>
      tpu.vector_store %arg5[%c0_37, %c0_38, %c0_39], %95 {strides = array<i32>} : memref<1x8x128xf32, #tpu.memory_space<vmem>>, vector<1x8x128xf32>,
    } else {
    }
    return
  }
  func.func @transform_0(%arg0: i32, %arg1: i32) -> (i32, i32) {
    %c1_i32 = arith.constant 1 : i32
    %0 = arith.muli %arg0, %c1_i32 : i32
    %1 = arith.addi %0, %arg1 : i32
    %c0_i32 = arith.constant 0 : i32
    %c0_i32_0 = arith.constant 0 : i32
    return %1, %c0_i32 : i32, i32
  }
  func.func @transform_1(%arg0: i32, %arg1: i32) -> (i32, i32) {
    %c1_i32 = arith.constant 1 : i32
    %0 = arith.muli %arg0, %c1_i32 : i32
    %1 = arith.addi %0, %arg1 : i32
    %c0_i32 = arith.constant 0 : i32
    %c0_i32_0 = arith.constant 0 : i32
    return %1, %c0_i32 : i32, i32
  }
  func.func @transform_2(%arg0: i32, %arg1: i32) -> (i32, i32) {
    %c1_i32 = arith.constant 1 : i32
    %0 = arith.muli %arg0, %c1_i32 : i32
    %1 = arith.addi %0, %arg1 : i32
    %c0_i32 = arith.constant 0 : i32
    %c0_i32_0 = arith.constant 0 : i32
    return %1, %c0_i32 : i32, i32
  }
  func.func @transform_3(%arg0: i32, %arg1: i32) -> (i32, i32, i32) {
    %c0_i32 = arith.constant 0 : i32
    %c0_i32_0 = arith.constant 0 : i32
    %c0_i32_1 = arith.constant 0 : i32
    return %arg0, %c0_i32, %c0_i32_0 : i32, i32, i32
  }
}

</mosaic_0001>

<llo_original>
// kernel: tpu_custom_call.1
$region0: #{tpu_custom_call.1}
  #allocation0 [shape = 'u32[]', space=smem, size = 0x4, offset = 0x4, fixed_abs, tag = 'smem constant byte address 0x4 - core index']
  #allocation1 [shape = 'u32[72,128]{1,0:T(1,128)}', space=vmem, size = 0x9000, scoped, tag = 'internal scratch']
  #allocation2 [shape = 'f32[1,8,128]{2,1,0:T(8,128)}', space=vmem, size = 0x1000, scoped, tag = 'scratch operand']
  %s0 = inlined_call_operand.vmem [shape: s32[8,1], index: 0, kind: input, shape index: {}]
  %s1 = inlined_call_operand.vmem [shape: f32[8,128], index: 1, kind: input, shape index: {}]
  %s2 = inlined_call_operand.hbm [shape: f32[8,128], index: 2, kind: input, shape index: {}]
  %s3 = inlined_call_operand.hbm [shape: f32[1,8,128], index: 3, kind: output, shape index: {}]
  %s4 = sld [smem:[#allocation0]]
  $region34: #{tpu_custom_call.1} parent=0
    _
  %s6 = ssub.s32 1, %s4
  %s7 = scalar_select 0, %s6, %s4
  $region1: #{tpu_custom_call.1} parent=0
    #allocation3 [shape = 'u8[4096]{0}', space=vmem, size = 0x1000, scoped, tag = 'input window, operand 2, single buffered']
    #allocation4 [shape = 's32[1]{0}', space=sflag, size = 0x4, scoped, tag = 'scoped memory for tpu_custom_call.1']
    #allocation5 [shape = 's32[1]{0}', space=sflag, size = 0x4, scoped, tag = 'scoped memory for tpu_custom_call.1']
    #allocation6 [shape = 'u8[4096]{0}', space=vmem, size = 0x1000, scoped, tag = 'output window, operand 0, single buffered']
    %8 = vsyncpa [#allocation4], 0
    %9 = vsyncpa [#allocation5], 0
    // Predicated region
    $region2: #{tpu_custom_call.1} parent=1 // pred_check
      _
    $region3: #{tpu_custom_call.1} parent=1 // pred_check_branch
      %11 = sbr.rel (0) target = $region5
    $region4: #{tpu_custom_call.1} parent=1 // pred_region
      %s12 = sadd.s32 0, 0
      %p13 = scmp.lt.s32.totalorder %s12, 0
      %s14 = scalar_select %p13, %s12, 0
      %s15 = smul.addr %s14, 8
      %s16 = scalar_lea.vmem %s0, %s15
      %s17 = sadd.s32 0, 0
    $region5: #{tpu_custom_call.1} parent=1 // pred_fallthru
      _
    // Predicated region
    $region6: #{tpu_custom_call.1} parent=1 // pred_check
      _
    $region7: #{tpu_custom_call.1} parent=1 // pred_check_branch
      %19 = sbr.rel (0) target = $region9
    $region8: #{tpu_custom_call.1} parent=1 // pred_region
      %s20 = sadd.s32 0, 0
      %p21 = scmp.lt.s32.totalorder %s20, 0
      %s22 = scalar_select %p21, %s20, 0
      %s23 = smul.addr %s22, 8
      %s24 = scalar_lea.vmem %s1, %s23
      %s25 = sadd.s32 0, 0
    $region9: #{tpu_custom_call.1} parent=1 // pred_fallthru
      _
    // Predicated region
    $region10: #{tpu_custom_call.1} parent=1 // pred_check
      _
    $region11: #{tpu_custom_call.1} parent=1 // pred_check_branch
      %27 = sbr.rel (0) target = $region13
    $region12: #{tpu_custom_call.1} parent=1 // pred_region
      %s28 = sadd.s32 0, 0
      %30 = vsyncadd [#allocation4], 0
      %s31 = smul.addr %s28, 8
      %s32 = scalar_lea.hbm %s2, %s31
      %s34 = sshll.u32 %s32, 4
      %s35 = int_to_ptr.hbm [resolvable:$true] %s34
      %s36 = sshll.u32 [#allocation3], 4
      %s37 = int_to_ptr.vmem [resolvable:$true] %s36
      %39 = dma.hbm_to_vmem [thread:$0]  %s35, 128, %s37, [#allocation4]
    $region13: #{tpu_custom_call.1} parent=1 // pred_fallthru
      _
    // Predicated region
    $region14: #{tpu_custom_call.1} parent=1 // pred_check
      _
    $region15: #{tpu_custom_call.1} parent=1 // pred_check_branch
      %41 = sbr.rel (0) target = $region17
    $region16: #{tpu_custom_call.1} parent=1 // pred_region
      %43 = dma.done [#allocation4], 128
    $region17: #{tpu_custom_call.1} parent=1 // pred_fallthru
      _
    %s44 = sadd.s32 0, 0
    %p45 = scmp.lt.s32.totalorder %s44, 0
    %s46 = scalar_select %p45, %s44, 0
    %s47 = smul.addr %s46, 8
    %s48 = scalar_lea.vmem %s0, %s47
    %s49 = sadd.s32 0, 0
    %p50 = scmp.lt.s32.totalorder %s49, 0
    %s51 = scalar_select %p50, %s49, 0
    %s52 = smul.addr %s51, 8
    %s53 = scalar_lea.vmem %s1, %s52
    %s54 = sadd.s32 0, 0
    %p55 = scmp.lt.s32.totalorder %s54, 0
    %s56 = scalar_select %p55, %s54, 0
    %s57 = smul.addr %s56, 8
    %s58 = scalar_lea.vmem %s0, %s57
    %s59 = sadd.s32 0, 0
    %s60 = sadd.s32 0, 0
    %p61 = scmp.lt.s32.totalorder %s60, 0
    %s62 = scalar_select %p61, %s60, 0
    %s63 = smul.addr %s62, 8
    %s64 = scalar_lea.vmem %s1, %s63
    %s65 = sadd.s32 0, 0
    %s66 = sadd.s32 0, 0
    %p67 = scmp.eq.s32.totalorder 0, 0
    // Predicated region
    $region18: #{tpu_custom_call.1} parent=1 // pred_check
      %p68 = pneg %p67
    $region19: #{tpu_custom_call.1} parent=1 // pred_check_branch
      %70 = sbr.rel (%p68) target = $region21
    $region20: #{tpu_custom_call.1} parent=1 // pred_region
      %71 = vst [vmem:[#allocation2] sm:$0xff] 0.0
    $region21: #{tpu_custom_call.1} parent=1 // pred_fallthru
      _
    %v72 = vld [vmem:[#allocation3] sm:$0xff]
    %v73 = vld [vmem:[%s64] sm:$0xff]
    %v74 = vld [vmem:[%s58] sm:$0xff]
    %s75 = sadd.s32 0, 0
    %v76 = vlaneseq
    %v77 = vshrl.u32 %v76, 7
    %s78 = smul.u32 %s75, 8
    %v79 = vstv %s78
    %v80 = vadd.s32 %v77, %v79
    %vm81 = vcmp.lt.s32.totalorder %v80, 8
    %v82 = vlaneseq
    %v83 = vand.u32 %v82, 127
    %84 = vset.pattern.permute.xlu0 0
    %85 = vperm.xlu0 %84, %v74
    %v86 = vpop.permute.xlu0 %85
    %vm87 = vcmp.eq.s32.totalorder %v83, %v86
    %v88 = vsel %vm87, 1, 0
    %v89 = vcvt.s32.f32 %v88
    %v90 = vmul.f32 %v72, 0.5
    %91 = vmax.xlane.f32.xlu0 %v90
    %v92 = vpop.xlane.xlu0 %91
    %v93 = vsub.f32 %v90, %v92
    %v94 = vmul.f32 %v93, 1.442695
    %v95 = vpow.pop %v94
    %96 = vadd.xlane.f32.xlu0 %v95
    %v97 = vpop.xlane.xlu0 %96
    %v98 = vlog2.pop %v97
    %v99 = vmul.f32 %v98, 0.6931472
    %v100 = vsub.f32 %v93, %v99
    %v101 = vmul.f32 %v73, 0.5
    %102 = vmax.xlane.f32.xlu0 %v101
    %v103 = vpop.xlane.xlu0 %102
    %v104 = vsub.f32 %v101, %v103
    %v105 = vmul.f32 %v104, 1.442695
    %v106 = vpow.pop %v105
    %107 = vadd.xlane.f32.xlu0 %v106
    %v108 = vpop.xlane.xlu0 %107
    %v109 = vlog2.pop %v108
    %v110 = vmul.f32 %v109, 0.6931472
    %v111 = vsub.f32 %v104, %v110
    %v112 = vmul.f32 %v111, 1.442695
    %v113 = vpow.pop %v112
    %v114 = vsub.f32 %v111, %v100
    %v115 = vmul.f32 %v113, %v114
    %116 = vadd.xlane.f32.xlu0 %v115
    %v117 = vpop.xlane.xlu0 %116
    %v118 = vsel %vm81, %v117, 0.0
    %vm119 = vcmask 7168
    %v120 = vsel %vm119, %v118, 0.0
    %121 = vadd.xlane.f32.xlu0 %v120
    %v122 = vpop.xlane.xlu0 %121
    %v123 = vrot.slane %v122, 4
    %v124 = vadd.f32 %v122, %v123
    %v125 = vrot.slane %v124, 2
    %v126 = vadd.f32 %v124, %v125
    %v127 = vrot.slane %v126, 1
    %v128 = vadd.f32 %v126, %v127
    %s129 = vtos %v128
    %130 = vmax.xlane.f32.xlu0 %v72
    %v131 = vpop.xlane.xlu0 %130
    %v132 = vsub.f32 %v72, %v131
    %v133 = vmul.f32 %v132, 1.442695
    %v134 = vpow.pop %v133
    %135 = vadd.xlane.f32.xlu0 %v134
    %v136 = vpop.xlane.xlu0 %135
    %v137 = vlog2.pop %v136
    %v138 = vmul.f32 %v137, 0.6931472
    %v139 = vsub.f32 %v132, %v138
    %v140 = vmul.f32 %v89, %v139
    %141 = vadd.xlane.f32.xlu0 %v140
    %v142 = vpop.xlane.xlu0 %141
    %v143 = vsub.f32 0.0, %v142
    %v144 = vsel %vm81, %v143, 0.0
    %v145 = vsel %vm119, %v144, 0.0
    %146 = vadd.xlane.f32.xlu0 %v145
    %v147 = vpop.xlane.xlu0 %146
    %v148 = vrot.slane %v147, 4
    %v149 = vadd.f32 %v147, %v148
    %v150 = vrot.slane %v149, 2
    %v151 = vadd.f32 %v149, %v150
    %v152 = vrot.slane %v151, 1
    %v153 = vadd.f32 %v151, %v152
    %s154 = vtos %v153
    %vm155 = vcmp.eq.s32.totalorder %v83, 0
    %v156 = vstv %s129
    %v157 = vsel %vm155, %v156, 0.0
    %v158 = vadd.f32 %v157, 0.0
    %vm159 = vcmp.eq.s32.totalorder %v83, 1
    %v160 = vstv %s154
    %v161 = vsel %vm159, %v160, 0.0
    %v162 = vadd.f32 %v158, %v161
    %v163 = vld [vmem:[#allocation2] sm:$0xff]
    %v164 = vadd.f32 %v163, %v162
    %165 = vst [vmem:[#allocation2] sm:$0xff] %v164
    // Predicated region
    $region22: #{tpu_custom_call.1} parent=1 // pred_check
      %p166 = pneg %p67
    $region23: #{tpu_custom_call.1} parent=1 // pred_check_branch
      %168 = sbr.rel (%p166) target = $region25
    $region24: #{tpu_custom_call.1} parent=1 // pred_region
      %v169 = vld [vmem:[#allocation2] sm:$0xff]
      %170 = vst [vmem:[#allocation6] sm:$0xff] %v169
    $region25: #{tpu_custom_call.1} parent=1 // pred_fallthru
      _
    // Predicated region
    $region26: #{tpu_custom_call.1} parent=1 // pred_check
      _
    $region27: #{tpu_custom_call.1} parent=1 // pred_check_branch
      %172 = sbr.rel (0) target = $region29
    $region28: #{tpu_custom_call.1} parent=1 // pred_region
      %174 = vsyncadd [#allocation5], 0
      %s176 = sshll.u32 [#allocation6], 4
      %s177 = int_to_ptr.vmem [resolvable:$true] %s176
      %s178 = sshll.u32 %s3, 4
      %s179 = int_to_ptr.hbm [resolvable:$true] %s178
      %181 = dma.vmem_to_hbm [thread:$0]  %s177, 128, %s179, [#allocation5]
    $region29: #{tpu_custom_call.1} parent=1 // pred_fallthru
      _
    // Predicated region
    $region30: #{tpu_custom_call.1} parent=1 // pred_check
      _
    $region31: #{tpu_custom_call.1} parent=1 // pred_check_branch
      %183 = sbr.rel (0) target = $region33
    $region32: #{tpu_custom_call.1} parent=1 // pred_region
      %185 = dma.done [#allocation5], 128
    $region33: #{tpu_custom_call.1} parent=1 // pred_fallthru
      _
    %186 = vsyncpa [#allocation4], 1
    %187 = vsyncpa [#allocation5], 1

</llo_original>
